<compile_context>
chip_gen: v5e
topology: v5e:2x2
jax: 0.10.0
libtpu: 0.0.40
codegen_flags: <defaults>
</compile_context>

<pallas_src>
import math
from functools import partial

import jax
import jax.numpy as jnp
from jax import lax
from jax.experimental import pallas as pl
from jax.experimental.pallas import tpu as pltpu


def _mha_kernel(mask_ref, x_ref, wqkv_ref, bqkv_ref, wo_ref, bo_ref,
                out_ref, acc_ref, *, head_dim, shared_qkv):
    """One (T-block, head) grid step.

    Blocks seen by the kernel:
      mask_ref : (E, E)        f32 additive causal bias (0 / -1e30), resident.
      x_ref    : (S, Tb, E, F) bf16 input slab; S == 1 when key is value is query.
      wqkv_ref : (1, F, 3D)    bf16 fused per-head projection weight [q|k|v],
                               softmax scale pre-folded into the q columns.
      bqkv_ref : (1, 1, 3D)    f32 fused per-head projection bias.
      wo_ref   : (1, D, F)     bf16 per-head slice of the output projection.
      bo_ref   : (1, F)        f32 output projection bias.
      out_ref  : (Tb, E, F)    written once per T-block (at the last head).
      acc_ref  : (Tb*E, F)     f32 scratch accumulating the output projection
                               across the head grid axis.
    """
    h = pl.program_id(1)
    _, Tb, E, F = x_ref.shape
    D = head_dim

    w = wqkv_ref[0]                      # (F, 3D) bf16
    b = bqkv_ref[0]                      # (1, 3D) f32

    if shared_qkv:
        # One fused projection matmul + one fused bias add.
        x = x_ref[0].reshape(Tb * E, F)
        qkv = jnp.dot(x, w, preferred_element_type=jnp.float32) + b   # (Tb*E, 3D)
        q, k, v = qkv[:, :D], qkv[:, D:2 * D], qkv[:, 2 * D:]
    else:
        xq = x_ref[0].reshape(Tb * E, F)
        xk = x_ref[1].reshape(Tb * E, F)
        xv = x_ref[2].reshape(Tb * E, F)
        q = jnp.dot(xq, w[:, :D], preferred_element_type=jnp.float32) + b[:, :D]
        k = jnp.dot(xk, w[:, D:2 * D], preferred_element_type=jnp.float32) + b[:, D:2 * D]
        v = jnp.dot(xv, w[:, 2 * D:], preferred_element_type=jnp.float32) + b[:, 2 * D:]

    # Single-head attention for head `h`, batched over the Tb rows of the block
    # (single batch dim -> well-supported batched dot_general).  Matmul operands
    # are bf16; accumulation and all softmax math stay f32.
    q3 = q.reshape(Tb, E, D).astype(jnp.bfloat16)
    k3 = k.reshape(Tb, E, D).astype(jnp.bfloat16)
    v3 = v.reshape(Tb, E, D).astype(jnp.bfloat16)

    s = lax.dot_general(q3, k3, (((2,), (2,)), ((0,), (0,))),
                        preferred_element_type=jnp.float32)           # (Tb, E, E)
    s = s + mask_ref[...]                                              # causal bias
    s = s - jnp.max(s, axis=-1, keepdims=True)
    p = jnp.exp(s)
    denom = jnp.sum(p, axis=-1, keepdims=True)
    p = p * pl.reciprocal(denom, approx=True)                          # EUP slot

    o = lax.dot_general(p.astype(jnp.bfloat16), v3,
                        (((2,), (1,)), ((0,), (0,))),
                        preferred_element_type=jnp.float32)            # (Tb, E, D)

    # Per-head slice of the output projection, accumulated over the head axis.
    @pl.when(h == 0)
    def _():
        acc_ref[...] = jnp.zeros_like(acc_ref)

    acc_ref[...] += jnp.dot(o.reshape(Tb * E, D).astype(jnp.bfloat16), wo_ref[0],
                            preferred_element_type=jnp.float32)        # (Tb*E, F)

    @pl.when(h == pl.num_programs(1) - 1)
    def _():
        out = acc_ref[...] + bo_ref[...]
        # TODO(synk): the F=32 store is lane-masked; a lane-dense (Tb, E*F)
        # store would need a minor-dim relayout that costs more than it saves
        # at these shapes, so the narrow store is kept.
        out_ref[...] = out.reshape(Tb, E, F).astype(out_ref.dtype)


def _pick_t_block(T, t_block, E, F, D, vmem_budget_bytes=20 * 1024 * 1024):
    """Largest Tb that divides T, respects the requested cap, fits a VMEM budget
    and keeps >= 2 steps on the parallel T grid axis (megacore / pipelining)."""
    # Rough f32 bytes live per T-row in one grid step: stacked input block
    # (up to 3 streams, double-buffered), fused qkv + bf16 copies, score/prob
    # matrices, PV output, accumulator + output block.
    per_row = 4 * E * (2 * 3 * F + 3 * 3 * D + 2 * E + 2 * D + 2 * F)
    vmem_cap = max(1, vmem_budget_bytes // max(per_row, 1))
    tb = max(1, min(t_block, T, vmem_cap))
    while T % tb:
        tb -= 1
    while T >= 2 and T // tb < 2:       # keep the parallel T axis >= 2 steps
        tb = max(1, tb // 2)
        while T % tb:
            tb -= 1
    return tb


def mem_efficient_mha(key, value, query, params, *, n_heads, embed_dim,
                      t_block=128, matmul_dtype=jnp.bfloat16):
    """Forward pass of MemoryEfficientMHA. key/value/query: (T, E, F=embed_dim).

    params = (wq, bq, wk, bk, wv, bv, wo, bo) in PyTorch nn.Linear layout:
    w: (out_features, in_features), b: (1, out_features).
    """
    T, E, F = key.shape
    assert key.shape == value.shape == query.shape
    assert F == embed_dim
    H, D = n_heads, embed_dim
    wq, bq, wk, bk, wv, bv, wo, bo = params

    # ---- wrapper-side layout plumbing (runs once, outside the kernel) ----
    scale = jnp.float32(1.0 / math.sqrt(D))

    def head_major(w, b):                                   # w: (H*D, F), b: (1, H*D)
        # x @ head_major(w)[h] == (x @ w.T)[:, h*D:(h+1)*D]
        w_h = jnp.transpose(w.reshape(H, D, F), (0, 2, 1))  # (H, F, D)
        b_h = b.reshape(H, 1, D)
        return w_h, b_h

    wq_h, bq_h = head_major(wq * scale, bq * scale)         # fold softmax scale into q
    wk_h, bk_h = head_major(wk, bk)
    wv_h, bv_h = head_major(wv, bv)
    wqkv_h = jnp.concatenate([wq_h, wk_h, wv_h], axis=-1).astype(matmul_dtype)  # (H, F, 3D)
    bqkv_h = jnp.concatenate([bq_h, bk_h, bv_h], axis=-1).astype(jnp.float32)   # (H, 1, 3D)
    wo_h = wo.T.reshape(H, D, F).astype(matmul_dtype)                            # (H, D, F)
    bo2d = bo.reshape(1, F).astype(jnp.float32)

    # Additive causal bias (same semantics as _init_causal_mask's tril).
    tril = jnp.tril(jnp.ones((E, E), jnp.bool_))
    mask_bias = jnp.where(tril, 0.0, -1e30).astype(jnp.float32)

    # key is value is query in Providence: stream the input once (1/3 the DMA).
    shared = (key is value) and (value is query)
    x_stack = (query[None] if shared
               else jnp.stack([query, key, value], axis=0)).astype(matmul_dtype)
    S = x_stack.shape[0]

    tb = _pick_t_block(T, t_block, E, F, D)
    grid = (T // tb, H)

    kernel = partial(_mha_kernel, head_dim=D, shared_qkv=shared)

    return pl.pallas_call(
        kernel,
        out_shape=jax.ShapeDtypeStruct((T, E, F), key.dtype),
        grid=grid,
        in_specs=[
            pl.BlockSpec((E, E), lambda t, h: (0, 0)),               # causal bias (resident)
            pl.BlockSpec((S, tb, E, F), lambda t, h: (0, t, 0, 0)),  # input slab (h-invariant)
            pl.BlockSpec((1, F, 3 * D), lambda t, h: (h, 0, 0)),     # fused per-head QKV weight
            pl.BlockSpec((1, 1, 3 * D), lambda t, h: (h, 0, 0)),     # fused per-head QKV bias
            pl.BlockSpec((1, D, F), lambda t, h: (h, 0, 0)),         # per-head to_out weight
            pl.BlockSpec((1, F), lambda t, h: (0, 0)),               # to_out bias
        ],
        out_specs=pl.BlockSpec((tb, E, F), lambda t, h: (t, 0, 0)),
        scratch_shapes=[pltpu.VMEM((tb * E, F), jnp.float32)],       # output-proj accumulator
        compiler_params=pltpu.CompilerParams(
            dimension_semantics=("parallel", "arbitrary"),
            vmem_limit_bytes=48 * 1024 * 1024,   # explicit cap: headroom on v7x (64 MiB VMEM)
        ),
    )(mask_bias, x_stack, wqkv_h, bqkv_h, wo_h, bo2d)


def init_params(rng, n_heads, embed_dim):
    """Deterministic init mimicking nn.Linear default (U[-1/sqrt(in), 1/sqrt(in)])."""
    hd = n_heads * embed_dim
    keys = jax.random.split(rng, 8)

    def lin(kw, kb, out_dim, in_dim):
        bound = 1.0 / math.sqrt(in_dim)
        w = jax.random.uniform(kw, (out_dim, in_dim), jnp.float32, -bound, bound)
        b = jax.random.uniform(kb, (1, out_dim), jnp.float32, -bound, bound)
        return w, b

    wq, bq = lin(keys[0], keys[1], hd, embed_dim)
    wk, bk = lin(keys[2], keys[3], hd, embed_dim)
    wv, bv = lin(keys[4], keys[5], hd, embed_dim)
    wo, bo = lin(keys[6], keys[7], embed_dim, hd)
    return (wq, bq, wk, bk, wv, bv, wo, bo)


def reference(key, value, query, params, *, n_heads, embed_dim):
    """Pure-JAX f32 reference of the PyTorch forward (dropout p=0)."""
    wq, bq, wk, bk, wv, bv, wo, bo = params
    T, E, F = key.shape
    q = query @ wq.T + bq[0]
    k = key @ wk.T + bk[0]
    v = value @ wv.T + bv[0]
    q = q.reshape(T, E, n_heads, embed_dim)
    k = k.reshape(T, E, n_heads, embed_dim)
    v = v.reshape(T, E, n_heads, embed_dim)
    scale = 1.0 / math.sqrt(embed_dim)
    s = jnp.einsum('tqhd,tkhd->thqk', q, k) * scale
    mask = jnp.tril(jnp.ones((E, E), bool))
    s = jnp.where(mask[None, None], s, -1e30)
    p = jax.nn.softmax(s, axis=-1)
    o = jnp.einsum('thqk,tkhd->tqhd', p, v).reshape(T, E, n_heads * embed_dim)
    return o @ wo.T + bo[0]


if __name__ == "__main__":
    n_heads = 4
    embed_dim = 32           # F == per-head dim (the module uses embed_dim for both)
    T, E, F = 8, 16, embed_dim

    root = jax.random.PRNGKey(0)
    k_params, k_x, k_k, k_v, k_q = jax.random.split(root, 5)
    params = init_params(k_params, n_heads, embed_dim)

    # 1) The Providence usage: key is value is query (single streamed input).
    x = jax.random.normal(k_x, (T, E, F), jnp.float32)
    out = mem_efficient_mha(x, x, x, params, n_heads=n_heads, embed_dim=embed_dim)
    out = jax.block_until_ready(out)
    ref = reference(x, x, x, params, n_heads=n_heads, embed_dim=embed_dim)
    assert out.shape == (T, E, F)
    # bf16 matmul operands + approx EUP reciprocal -> relaxed tolerance.
    assert jnp.allclose(out, ref, rtol=2e-2, atol=2e-2), "shared-input mismatch vs reference"

    # 2) General path: distinct key / value / query tensors.
    key_t = jax.random.normal(k_k, (T, E, F), jnp.float32)
    value_t = jax.random.normal(k_v, (T, E, F), jnp.float32)
    query_t = jax.random.normal(k_q, (T, E, F), jnp.float32)
    out2 = mem_efficient_mha(key_t, value_t, query_t, params,
                             n_heads=n_heads, embed_dim=embed_dim)
    out2 = jax.block_until_ready(out2)
    ref2 = reference(key_t, value_t, query_t, params,
                     n_heads=n_heads, embed_dim=embed_dim)
    assert jnp.allclose(out2, ref2, rtol=2e-2, atol=2e-2), "distinct-input mismatch vs reference"

    print("KERNEL_OK")
</pallas_src>

<mosaic_0001>
module attributes {stable_mosaic.version = 11 : i64} {
  func.func @_mha_kernel(%arg0: i32, %arg1: i32, %arg2: memref<16x16xf32, #tpu.memory_space<vmem>>, %arg3: memref<1x4x16x32xbf16, #tpu.memory_space<vmem>>, %arg4: memref<1x32x96xbf16, #tpu.memory_space<vmem>>, %arg5: memref<1x1x96xf32, #tpu.memory_space<vmem>>, %arg6: memref<1x32x32xbf16, #tpu.memory_space<vmem>>, %arg7: memref<1x32xf32, #tpu.memory_space<vmem>>, %arg8: memref<4x16x32xf32, #tpu.memory_space<vmem>>, %arg9: memref<64x32xf32, #tpu.memory_space<vmem>>) attributes {dimension_semantics = [#tpu.dimension_semantics<parallel>, #tpu.dimension_semantics<arbitrary>], iteration_bounds = array<i64: 2, 4>, scalar_prefetch = 0 : i64, scratch_operands = 1 : i64, tpu.core_type = #tpu.core_type<tc>, window_params = [{pipeline_mode = #tpu.pipeline_mode<synchronous>, transform_indices = @transform_0, window_bounds = array<i64: 16, 16>}, {transform_indices = @transform_1, window_bounds = array<i64: 1, 4, 16, 32>}, {transform_indices = @transform_2, window_bounds = array<i64: 1, 32, 96>}, {transform_indices = @transform_3, window_bounds = array<i64: 1, 1, 96>}, {transform_indices = @transform_4, window_bounds = array<i64: 1, 32, 32>}, {pipeline_mode = #tpu.pipeline_mode<synchronous>, transform_indices = @transform_5, window_bounds = array<i64: 1, 32>}, {transform_indices = @transform_6, window_bounds = array<i64: 4, 16, 32>}]} {
    %c0 = arith.constant 0 : index
    %c0_0 = arith.constant 0 : index
    %c0_1 = arith.constant 0 : index
    %0 = vector.load %arg4[%c0, %c0_0, %c0_1] : memref<1x32x96xbf16, #tpu.memory_space<vmem>>, vector<1x32x96xbf16>
    %1 = vector.shape_cast %0 : vector<1x32x96xbf16> to vector<32x96xbf16>
    %c0_2 = arith.constant 0 : index
    %c0_3 = arith.constant 0 : index
    %c0_4 = arith.constant 0 : index
    %2 = vector.load %arg5[%c0_2, %c0_3, %c0_4] : memref<1x1x96xf32, #tpu.memory_space<vmem>>, vector<1x1x96xf32>
    %3 = vector.shape_cast %2 : vector<1x1x96xf32> to vector<1x96xf32>
    %c0_5 = arith.constant 0 : index
    %c0_6 = arith.constant 0 : index
    %c0_7 = arith.constant 0 : index
    %c0_8 = arith.constant 0 : index
    %4 = vector.load %arg3[%c0_5, %c0_6, %c0_7, %c0_8] : memref<1x4x16x32xbf16, #tpu.memory_space<vmem>>, vector<1x4x16x32xbf16>
    %5 = vector.shape_cast %4 : vector<1x4x16x32xbf16> to vector<4x16x32xbf16>
    %6 = vector.shape_cast %5 : vector<4x16x32xbf16> to vector<64x32xbf16>
    %cst = arith.constant dense<0.000000e+00> : vector<64x96xf32>
    %7 = tpu.matmul %6, %1, %cst {dimension_numbers = #tpu.dot_dimension_numbers<[1], [0], [0], [1], [0, 0, 1, 1], [], []>} : vector<64x32xbf16>, vector<32x96xbf16>, vector<64x96xf32> -> vector<64x96xf32>
    %8 = vector.broadcast %3 : vector<1x96xf32> to vector<64x96xf32>
    %9 = arith.addf %7, %8 : vector<64x96xf32>
    %10 = vector.extract_strided_slice %9 {offsets = [0, 0], sizes = [64, 32], strides = [1, 1]} : vector<64x96xf32> to vector<64x32xf32>
    %11 = vector.extract_strided_slice %9 {offsets = [0, 32], sizes = [64, 32], strides = [1, 1]} : vector<64x96xf32> to vector<64x32xf32>
    %12 = vector.extract_strided_slice %9 {offsets = [0, 64], sizes = [64, 32], strides = [1, 1]} : vector<64x96xf32> to vector<64x32xf32>
    %13 = vector.shape_cast %10 : vector<64x32xf32> to vector<4x16x32xf32>
    %14 = arith.truncf %13 : vector<4x16x32xf32> to vector<4x16x32xbf16>
    %15 = vector.shape_cast %11 : vector<64x32xf32> to vector<4x16x32xf32>
    %16 = arith.truncf %15 : vector<4x16x32xf32> to vector<4x16x32xbf16>
    %17 = vector.shape_cast %12 : vector<64x32xf32> to vector<4x16x32xf32>
    %18 = arith.truncf %17 : vector<4x16x32xf32> to vector<4x16x32xbf16>
    %cst_9 = arith.constant dense<0.000000e+00> : vector<4x16x16xf32>
    %19 = tpu.matmul %14, %16, %cst_9 {dimension_numbers = #tpu.dot_dimension_numbers<[2], [2], [1], [1], [0, 0, 0, 1, 1, 1], [0], [0]>} : vector<4x16x32xbf16>, vector<4x16x32xbf16>, vector<4x16x16xf32> -> vector<4x16x16xf32>
    %c0_10 = arith.constant 0 : index
    %c0_11 = arith.constant 0 : index
    %20 = vector.load %arg2[%c0_10, %c0_11] : memref<16x16xf32, #tpu.memory_space<vmem>>, vector<16x16xf32>
    %21 = vector.shape_cast %20 : vector<16x16xf32> to vector<1x16x16xf32>
    %22 = vector.broadcast %21 : vector<1x16x16xf32> to vector<4x16x16xf32>
    %23 = arith.addf %19, %22 : vector<4x16x16xf32>
    %cst_12 = arith.constant dense<0xFF800000> : vector<4x16xf32>
    %24 = vector.multi_reduction <maximumf>, %23, %cst_12 [2] : vector<4x16x16xf32> to vector<4x16xf32>
    %25 = vector.shape_cast %24 : vector<4x16xf32> to vector<4x16x1xf32>
    %26 = vector.broadcast %25 : vector<4x16x1xf32> to vector<4x16x16xf32>
    %27 = arith.subf %23, %26 : vector<4x16x16xf32>
    %28 = math.exp %27 : vector<4x16x16xf32>
    %cst_13 = arith.constant dense<0.000000e+00> : vector<4x16xf32>
    %29 = vector.multi_reduction <add>, %28, %cst_13 [2] : vector<4x16x16xf32> to vector<4x16xf32>
    %30 = vector.shape_cast %29 : vector<4x16xf32> to vector<4x16x1xf32>
    %31 = tpu.reciprocal %30 {approx = true} : vector<4x16x1xf32> -> vector<4x16x1xf32>
    %32 = vector.broadcast %31 : vector<4x16x1xf32> to vector<4x16x16xf32>
    %33 = arith.mulf %28, %32 : vector<4x16x16xf32>
    %34 = arith.truncf %33 : vector<4x16x16xf32> to vector<4x16x16xbf16>
    %cst_14 = arith.constant dense<0.000000e+00> : vector<4x16x32xf32>
    %35 = tpu.matmul %34, %18, %cst_14 {dimension_numbers = #tpu.dot_dimension_numbers<[2], [1], [1], [2], [0, 0, 0, 1, 1, 2], [0], [0]>} : vector<4x16x16xbf16>, vector<4x16x32xbf16>, vector<4x16x32xf32> -> vector<4x16x32xf32>
    %c0_i32 = arith.constant 0 : i32
    %36 = arith.cmpi eq, %arg1, %c0_i32 : i32
    %37 = arith.extui %36 : i1 to i32
    %c0_i32_15 = arith.constant 0 : i32
    %38 = arith.cmpi ne, %37, %c0_i32_15 : i32
    scf.if %38 {
      %cst_25 = arith.constant 0.000000e+00 : f32
      %50 = vector.broadcast %cst_25 : f32 to vector<64x32xf32>
      %c0_26 = arith.constant 0 : index
      %c0_27 = arith.constant 0 : index
      %51 = vector.load %arg9[%c0_26, %c0_27] : memref<64x32xf32, #tpu.memory_space<vmem>>, vector<64x32xf32>
      tpu.vector_store %arg9[%c0_26, %c0_27], %50 {strides = array<i32>} : memref<64x32xf32, #tpu.memory_space<vmem>>, vector<64x32xf32>,
    } else {
    }
    %c0_16 = arith.constant 0 : index
    %c0_17 = arith.constant 0 : index
    %39 = vector.load %arg9[%c0_16, %c0_17] : memref<64x32xf32, #tpu.memory_space<vmem>>, vector<64x32xf32>
    %40 = vector.shape_cast %35 : vector<4x16x32xf32> to vector<64x32xf32>
    %41 = arith.truncf %40 : vector<64x32xf32> to vector<64x32xbf16>
    %c0_18 = arith.constant 0 : index
    %c0_19 = arith.constant 0 : index
    %c0_20 = arith.constant 0 : index
    %42 = vector.load %arg6[%c0_18, %c0_19, %c0_20] : memref<1x32x32xbf16, #tpu.memory_space<vmem>>, vector<1x32x32xbf16>
    %43 = vector.shape_cast %42 : vector<1x32x32xbf16> to vector<32x32xbf16>
    %cst_21 = arith.constant dense<0.000000e+00> : vector<64x32xf32>
    %44 = tpu.matmul %41, %43, %cst_21 {dimension_numbers = #tpu.dot_dimension_numbers<[1], [0], [0], [1], [0, 0, 1, 1], [], []>} : vector<64x32xbf16>, vector<32x32xbf16>, vector<64x32xf32> -> vector<64x32xf32>
    %45 = arith.addf %39, %44 : vector<64x32xf32>
    %c0_22 = arith.constant 0 : index
    %c0_23 = arith.constant 0 : index
    %46 = vector.load %arg9[%c0_22, %c0_23] : memref<64x32xf32, #tpu.memory_space<vmem>>, vector<64x32xf32>
    tpu.vector_store %arg9[%c0_22, %c0_23], %45 {strides = array<i32>} : memref<64x32xf32, #tpu.memory_space<vmem>>, vector<64x32xf32>,
    %c3_i32 = arith.constant 3 : i32
    %47 = arith.cmpi eq, %arg1, %c3_i32 : i32
    %48 = arith.extui %47 : i1 to i32
    %c0_i32_24 = arith.constant 0 : i32
    %49 = arith.cmpi ne, %48, %c0_i32_24 : i32
    scf.if %49 {
      %c0_25 = arith.constant 0 : index
      %c0_26 = arith.constant 0 : index
      %50 = vector.load %arg9[%c0_25, %c0_26] : memref<64x32xf32, #tpu.memory_space<vmem>>, vector<64x32xf32>
      %c0_27 = arith.constant 0 : index
      %c0_28 = arith.constant 0 : index
      %51 = vector.load %arg7[%c0_27, %c0_28] : memref<1x32xf32, #tpu.memory_space<vmem>>, vector<1x32xf32>
      %52 = vector.broadcast %51 : vector<1x32xf32> to vector<64x32xf32>
      %53 = arith.addf %50, %52 : vector<64x32xf32>
      %54 = vector.shape_cast %53 : vector<64x32xf32> to vector<4x16x32xf32>
      %c0_29 = arith.constant 0 : index
      %c0_30 = arith.constant 0 : index
      %c0_31 = arith.constant 0 : index
      %55 = vector.load %arg8[%c0_29, %c0_30, %c0_31] : memref<4x16x32xf32, #tpu.memory_space<vmem>>, vector<4x16x32xf32>
      tpu.vector_store %arg8[%c0_29, %c0_30, %c0_31], %54 {strides = array<i32>} : memref<4x16x32xf32, #tpu.memory_space<vmem>>, vector<4x16x32xf32>,
    } else {
    }
    return
  }
  func.func @transform_0(%arg0: i32, %arg1: i32) -> (i32, i32) {
    %c0_i32 = arith.constant 0 : i32
    %c0_i32_0 = arith.constant 0 : i32
    %c0_i32_1 = arith.constant 0 : i32
    return %c0_i32, %c0_i32_0 : i32, i32
  }
  func.func @transform_1(%arg0: i32, %arg1: i32) -> (i32, i32, i32, i32) {
    %c0_i32 = arith.constant 0 : i32
    %c0_i32_0 = arith.constant 0 : i32
    %c0_i32_1 = arith.constant 0 : i32
    %c0_i32_2 = arith.constant 0 : i32
    return %c0_i32, %arg0, %c0_i32_0, %c0_i32_1 : i32, i32, i32, i32
  }
  func.func @transform_2(%arg0: i32, %arg1: i32) -> (i32, i32, i32) {
    %c0_i32 = arith.constant 0 : i32
    %c0_i32_0 = arith.constant 0 : i32
    %c0_i32_1 = arith.constant 0 : i32
    return %arg1, %c0_i32, %c0_i32_0 : i32, i32, i32
  }
  func.func @transform_3(%arg0: i32, %arg1: i32) -> (i32, i32, i32) {
    %c0_i32 = arith.constant 0 : i32
    %c0_i32_0 = arith.constant 0 : i32
    %c0_i32_1 = arith.constant 0 : i32
    return %arg1, %c0_i32, %c0_i32_0 : i32, i32, i32
  }
  func.func @transform_4(%arg0: i32, %arg1: i32) -> (i32, i32, i32) {
    %c0_i32 = arith.constant 0 : i32
    %c0_i32_0 = arith.constant 0 : i32
    %c0_i32_1 = arith.constant 0 : i32
    return %arg1, %c0_i32, %c0_i32_0 : i32, i32, i32
  }
  func.func @transform_5(%arg0: i32, %arg1: i32) -> (i32, i32) {
    %c0_i32 = arith.constant 0 : i32
    %c0_i32_0 = arith.constant 0 : i32
    %c0_i32_1 = arith.constant 0 : i32
    return %c0_i32, %c0_i32_0 : i32, i32
  }
  func.func @transform_6(%arg0: i32, %arg1: i32) -> (i32, i32, i32) {
    %c0_i32 = arith.constant 0 : i32
    %c0_i32_0 = arith.constant 0 : i32
    %c0_i32_1 = arith.constant 0 : i32
    return %arg0, %c0_i32, %c0_i32_0 : i32, i32, i32
  }
}

</mosaic_0001>

<llo_original>
// kernel: tpu_custom_call.1
$region0: #{tpu_custom_call.1}
  #allocation0 [shape = 'u32[]', space=smem, size = 0x4, offset = 0x4, fixed_abs, tag = 'smem constant byte address 0x4 - core index']
  #allocation1 [shape = 'u32[72,128]{1,0:T(1,128)}', space=vmem, size = 0x9000, scoped, tag = 'internal scratch']
  #allocation2 [shape = 'f32[64,32]{1,0:T(8,128)}', space=vmem, size = 0x8000, scoped, tag = 'scratch operand']
  %s0 = inlined_call_operand.hbm [shape: f32[16,16], index: 0, kind: input, shape index: {}]
  %s1 = inlined_call_operand.hbm [shape: bf16[1,8,16,32], index: 1, kind: input, shape index: {}]
  %s2 = inlined_call_operand.hbm [shape: bf16[4,32,96], index: 2, kind: input, shape index: {}]
  %s3 = inlined_call_operand.hbm [shape: f32[4,1,96], index: 3, kind: input, shape index: {}]
  %s4 = inlined_call_operand.hbm [shape: bf16[4,32,32], index: 4, kind: input, shape index: {}]
  %s5 = inlined_call_operand.vmem [shape: f32[1,32], index: 5, kind: input, shape index: {}]
  %s6 = inlined_call_operand.hbm [shape: f32[8,16,32], index: 6, kind: output, shape index: {}]
  %s7 = sld [smem:[#allocation0]]
  $region85: #{tpu_custom_call.1} parent=0
    _
  %s9 = ssub.s32 1, %s7
  %s10 = scalar_select 0, %s9, %s7
  $region1: #{tpu_custom_call.1} parent=0
    #allocation3 [shape = 'u8[8192]{0}', space=vmem, size = 0x2000, scoped, tag = 'input window, operand 0, single buffered']
    #allocation4 [shape = 's32[2]{0}', space=sflag, size = 0x8, scoped, tag = 'scoped memory for tpu_custom_call.1']
    #allocation5 [shape = 's32[2]{0}', space=sflag, size = 0x8, scoped, tag = 'scoped memory for tpu_custom_call.1']
    #allocation6 [shape = 'u8[32768]{0}', space=vmem, size = 0x8000, scoped, tag = 'input window, operand 1']
    #allocation7 [shape = 's32[2]{0}', space=sflag, size = 0x8, scoped, tag = 'scoped memory for tpu_custom_call.1']
    #allocation8 [shape = 'u8[16384]{0}', space=vmem, size = 0x4000, scoped, tag = 'input window, operand 2']
    #allocation9 [shape = 'u8[1024]{0}', space=vmem, size = 0x400, scoped, tag = 'input window, operand 3']
    #allocation10 [shape = 's32[2]{0}', space=sflag, size = 0x8, scoped, tag = 'scoped memory for tpu_custom_call.1']
    #allocation11 [shape = 'u8[16384]{0}', space=vmem, size = 0x4000, scoped, tag = 'input window, operand 4']
    #allocation12 [shape = 'u8[65536]{0}', space=vmem, size = 0x10000, scoped, tag = 'output window, operand 0']
    %11 = vsyncpa [#allocation4], 0
    %12 = vsyncpa [#allocation7], 0
    %s13 = scalar_lea.sflag [#allocation7], 1
    %14 = vsyncpa %s13, 0
    %15 = vsyncpa [#allocation10], 0
    %s16 = scalar_lea.sflag [#allocation10], 1
    %17 = vsyncpa %s16, 0
    %18 = vsyncpa [#allocation5], 0
    %s19 = scalar_lea.sflag [#allocation5], 1
    %20 = vsyncpa %s19, 0
    loop: start=0, step=1, limit=10
    $region2: #{tpu_custom_call.1} parent=1 // loop_pre_header
      _
    $region3: #{tpu_custom_call.1} parent=1 // loop_header
      %s22 = sphi 0, %s26
      %p23 = scmp.ge.s32.totalorder %s22, 10
      %s29 = sphi 0, %s41
      %s30 = sphi 0, %s37
      %s31 = sphi 0, %s29
      %s32 = sphi 0, %s30
      %s33 = sphi 0, %s31
      %s34 = sphi 0, %s32
      %s42 = sphi 0, %s42
      %s44 = sphi 0, %s42
      %s45 = sphi 0, %s44
      %s59 = sphi 0, %s45
      %s65 = sphi 0, %s67
      %s68 = sphi 0, %s65
      %s69 = sphi 0, %s68
      %s85 = sphi 0, %s69
      %s91 = sphi 0, %s93
      %s94 = sphi 0, %s91
      %s95 = sphi 0, %s94
      %s111 = sphi 0, %s95
      %s117 = sphi 0, %s119
      %s120 = sphi 0, %s117
      %s121 = sphi 0, %s120
      %s137 = sphi 0, %s121
      %s143 = sphi 0, %s145
      %s146 = sphi 0, %s143
      %s147 = sphi 0, %s146
      %s163 = sphi 0, %s147
      %s167 = sphi 0, %s167
      %s169 = sphi 0, %s167
      %s170 = sphi 0, %s169
      %s184 = sphi 0, %s170
      %s190 = sphi 0, %s192
      %s193 = sphi 0, %s190
      %s194 = sphi 0, %s193
      %s210 = sphi 0, %s194
    $region4: #{tpu_custom_call.1} parent=1 // loop_header_branch
      %25 = sbr.rel (%p23) target = $region8
    $region5: #{tpu_custom_call.1} parent=1 // loop_body
      %s27 = ssub.s32 %s22, 1
      %s28 = ssub.s32 %s22, 2
      %s35 = sadd.s32 1, %s30
      %p36 = scmp.ge.s32.totalorder %s35, 4
      %s37 = scalar_select %p36, 0, %s35
      %s38 = sadd.s32 1, %s29
      %s39 = scalar_select %p36, %s38, %s29
      %p40 = scmp.ge.s32.totalorder %s39, 2
      %s41 = scalar_select %p40, 0, %s39
      %s43 = sadd.s32 %s42, 1
      %p46 = scmp.eq.s32.totalorder %s22, 7
      %p47 = scmp.ne.s32.totalorder %s42, %s44
      %p48 = scmp.eq.s32.totalorder %s22, 0
      %p49 = por %p47, %p48
      %p50 = scmp.ne.s32.totalorder %s42, %s44
      %p51 = scmp.eq.s32.totalorder %s27, 7
      %p52 = por %p50, %p51
      %p53 = scmp.ne.s32.totalorder %s44, %s45
      %p54 = scmp.eq.s32.totalorder %s27, 0
      %p55 = por %p53, %p54
      %p56 = scmp.ne.s32.totalorder %s44, %s45
      %p57 = scmp.eq.s32.totalorder %s28, 7
      %p58 = por %p56, %p57
      %p60 = scmp.ne.s32.totalorder %s45, %s59
      %p61 = scmp.eq.s32.totalorder %s28, 0
      %p62 = por %p60, %p61
      %s63 = ssub.s32 %s29, %s41
      %p64 = scmp.eq.s32.totalorder %s63, 0
      %s66 = sadd.s32 %s65, 1
      %s67 = scalar_select %p64, %s65, %s66
      %p70 = pneg %p64
      %p71 = scmp.eq.s32.totalorder %s22, 7
      %p72 = por %p70, %p71
      %p73 = scmp.ne.s32.totalorder %s65, %s68
      %p74 = scmp.eq.s32.totalorder %s22, 0
      %p75 = por %p73, %p74
      %p76 = scmp.ne.s32.totalorder %s65, %s68
      %p77 = scmp.eq.s32.totalorder %s27, 7
      %p78 = por %p76, %p77
      %p79 = scmp.ne.s32.totalorder %s68, %s69
      %p80 = scmp.eq.s32.totalorder %s27, 0
      %p81 = por %p79, %p80
      %p82 = scmp.ne.s32.totalorder %s68, %s69
      %p83 = scmp.eq.s32.totalorder %s28, 7
      %p84 = por %p82, %p83
      %p86 = scmp.ne.s32.totalorder %s69, %s85
      %p87 = scmp.eq.s32.totalorder %s28, 0
      %p88 = por %p86, %p87
      %s89 = ssub.s32 %s30, %s37
      %p90 = scmp.eq.s32.totalorder %s89, 0
      %s92 = sadd.s32 %s91, 1
      %s93 = scalar_select %p90, %s91, %s92
      %p96 = pneg %p90
      %p97 = scmp.eq.s32.totalorder %s22, 7
      %p98 = por %p96, %p97
      %p99 = scmp.ne.s32.totalorder %s91, %s94
      %p100 = scmp.eq.s32.totalorder %s22, 0
      %p101 = por %p99, %p100
      %p102 = scmp.ne.s32.totalorder %s91, %s94
      %p103 = scmp.eq.s32.totalorder %s27, 7
      %p104 = por %p102, %p103
      %p105 = scmp.ne.s32.totalorder %s94, %s95
      %p106 = scmp.eq.s32.totalorder %s27, 0
      %p107 = por %p105, %p106
      %p108 = scmp.ne.s32.totalorder %s94, %s95
      %p109 = scmp.eq.s32.totalorder %s28, 7
      %p110 = por %p108, %p109
      %p112 = scmp.ne.s32.totalorder %s95, %s111
      %p113 = scmp.eq.s32.totalorder %s28, 0
      %p114 = por %p112, %p113
      %s115 = ssub.s32 %s30, %s37
      %p116 = scmp.eq.s32.totalorder %s115, 0
      %s118 = sadd.s32 %s117, 1
      %s119 = scalar_select %p116, %s117, %s118
      %p122 = pneg %p116
      %p123 = scmp.eq.s32.totalorder %s22, 7
      %p124 = por %p122, %p123
      %p125 = scmp.ne.s32.totalorder %s117, %s120
      %p126 = scmp.eq.s32.totalorder %s22, 0
      %p127 = por %p125, %p126
      %p128 = scmp.ne.s32.totalorder %s117, %s120
      %p129 = scmp.eq.s32.totalorder %s27, 7
      %p130 = por %p128, %p129
      %p131 = scmp.ne.s32.totalorder %s120, %s121
      %p132 = scmp.eq.s32.totalorder %s27, 0
      %p133 = por %p131, %p132
      %p134 = scmp.ne.s32.totalorder %s120, %s121
      %p135 = scmp.eq.s32.totalorder %s28, 7
      %p136 = por %p134, %p135
      %p138 = scmp.ne.s32.totalorder %s121, %s137
      %p139 = scmp.eq.s32.totalorder %s28, 0
      %p140 = por %p138, %p139
      %s141 = ssub.s32 %s30, %s37
      %p142 = scmp.eq.s32.totalorder %s141, 0
      %s144 = sadd.s32 %s143, 1
      %s145 = scalar_select %p142, %s143, %s144
      %p148 = pneg %p142
      %p149 = scmp.eq.s32.totalorder %s22, 7
      %p150 = por %p148, %p149
      %p151 = scmp.ne.s32.totalorder %s143, %s146
      %p152 = scmp.eq.s32.totalorder %s22, 0
      %p153 = por %p151, %p152
      %p154 = scmp.ne.s32.totalorder %s143, %s146
      %p155 = scmp.eq.s32.totalorder %s27, 7
      %p156 = por %p154, %p155
      %p157 = scmp.ne.s32.totalorder %s146, %s147
      %p158 = scmp.eq.s32.totalorder %s27, 0
      %p159 = por %p157, %p158
      %p160 = scmp.ne.s32.totalorder %s146, %s147
      %p161 = scmp.eq.s32.totalorder %s28, 7
      %p162 = por %p160, %p161
      %p164 = scmp.ne.s32.totalorder %s147, %s163
      %p165 = scmp.eq.s32.totalorder %s28, 0
      %p166 = por %p164, %p165
      %s168 = sadd.s32 %s167, 1
      %p171 = scmp.eq.s32.totalorder %s22, 7
      %p172 = scmp.ne.s32.totalorder %s167, %s169
      %p173 = scmp.eq.s32.totalorder %s22, 0
      %p174 = por %p172, %p173
      %p175 = scmp.ne.s32.totalorder %s167, %s169
      %p176 = scmp.eq.s32.totalorder %s27, 7
      %p177 = por %p175, %p176
      %p178 = scmp.ne.s32.totalorder %s169, %s170
      %p179 = scmp.eq.s32.totalorder %s27, 0
      %p180 = por %p178, %p179
      %p181 = scmp.ne.s32.totalorder %s169, %s170
      %p182 = scmp.eq.s32.totalorder %s28, 7
      %p183 = por %p181, %p182
      %p185 = scmp.ne.s32.totalorder %s170, %s184
      %p186 = scmp.eq.s32.totalorder %s28, 0
      %p187 = por %p185, %p186
      %s188 = ssub.s32 %s29, %s41
      %p189 = scmp.eq.s32.totalorder %s188, 0
      %s191 = sadd.s32 %s190, 1
      %s192 = scalar_select %p189, %s190, %s191
      %p195 = pneg %p189
      %p196 = scmp.eq.s32.totalorder %s22, 7
      %p197 = por %p195, %p196
      %p198 = scmp.ne.s32.totalorder %s190, %s193
      %p199 = scmp.eq.s32.totalorder %s22, 0
      %p200 = por %p198, %p199
      %p201 = scmp.ne.s32.totalorder %s190, %s193
      %p202 = scmp.eq.s32.totalorder %s27, 7
      %p203 = por %p201, %p202
      %p204 = scmp.ne.s32.totalorder %s193, %s194
      %p205 = scmp.eq.s32.totalorder %s27, 0
      %p206 = por %p204, %p205
      %p207 = scmp.ne.s32.totalorder %s193, %s194
      %p208 = scmp.eq.s32.totalorder %s28, 7
      %p209 = por %p207, %p208
      %p211 = scmp.ne.s32.totalorder %s194, %s210
      %p212 = scmp.eq.s32.totalorder %s28, 0
      %p213 = por %p211, %p212
      %p214 = scmp.le.s32.totalorder 1, %s22
      %p215 = scmp.lt.s32.totalorder %s22, 9
      %p216 = pnand %p214, %p215
      %p217 = pneg %p216
      // Predicated region
      $region9: #{tpu_custom_call.1} parent=5 // pred_check
        _
      $region10: #{tpu_custom_call.1} parent=5 // pred_check_branch
        %219 = sbr.rel (%p216) target = $region12
      $region11: #{tpu_custom_call.1} parent=5 // pred_region
        %s220 = ssub.s32 %s22, 1
        // Predicated region
        $region13: #{tpu_custom_call.1} parent=11 // pred_check
          %p221 = pneg %p55
        $region14: #{tpu_custom_call.1} parent=11 // pred_check_branch
          %223 = sbr.rel (%p221) target = $region16
        $region15: #{tpu_custom_call.1} parent=11 // pred_region
          %225 = vsyncadd [#allocation4], 0
          %s226 = sshll.u32 %s0, 4
          %s227 = int_to_ptr.hbm [resolvable:$true] %s226
          %s228 = sshll.u32 [#allocation3], 4
          %s229 = int_to_ptr.vmem [resolvable:$true] %s228
          %234 = dma.hbm_to_vmem [thread:$0]  %s227, 256, %s229, [#allocation4], 128, 128, 8
        $region16: #{tpu_custom_call.1} parent=11 // pred_fallthru
          _
        // Predicated region
        $region17: #{tpu_custom_call.1} parent=11 // pred_check
          %p235 = pneg %p180
        $region18: #{tpu_custom_call.1} parent=11 // pred_check_branch
          %237 = sbr.rel (%p235) target = $region20
        $region19: #{tpu_custom_call.1} parent=11 // pred_region
          _
        $region20: #{tpu_custom_call.1} parent=11 // pred_fallthru
          _
      $region12: #{tpu_custom_call.1} parent=5 // pred_fallthru
        _
      %p238 = scmp.lt.s32.totalorder %s22, 8
      // Predicated region
      $region21: #{tpu_custom_call.1} parent=5 // pred_check
        %p239 = pneg %p238
      $region22: #{tpu_custom_call.1} parent=5 // pred_check_branch
        %241 = sbr.rel (%p239) target = $region24
      $region23: #{tpu_custom_call.1} parent=5 // pred_region
        // Predicated region
        $region25: #{tpu_custom_call.1} parent=23 // pred_check
          %p242 = pneg %p75
        $region26: #{tpu_custom_call.1} parent=23 // pred_check_branch
          %244 = sbr.rel (%p242) target = $region28
        $region27: #{tpu_custom_call.1} parent=23 // pred_region
          %s245 = sand.u32 %s22, 1
          %s246 = scalar_lea.sflag [#allocation7], %s245
          %s247 = sand.u32 %s65, 1
          %s248 = smul.addr %s247, 32
          %s249 = scalar_lea.vmem [#allocation6], %s248
          %s250 = smul.u32 4, %s29
          %252 = vsyncadd %s246, 0
          %s253 = smul.addr %s250, 2
          %s254 = smul.addr %s253, 4
          %s255 = scalar_lea.hbm %s1, %s254
          %s256 = sshll.u32 %s255, 4
          %s257 = int_to_ptr.hbm [resolvable:$true] %s256
          %s258 = sshll.u32 %s249, 4
          %s259 = int_to_ptr.vmem [resolvable:$true] %s258
          %264 = dma.hbm_to_vmem [thread:$0]  %s257, 512, %s259, %s246, 64, 64, 4
        $region28: #{tpu_custom_call.1} parent=23 // pred_fallthru
          _
        // Predicated region
        $region29: #{tpu_custom_call.1} parent=23 // pred_check
          %p265 = pneg %p101
        $region30: #{tpu_custom_call.1} parent=23 // pred_check_branch
          %267 = sbr.rel (%p265) target = $region32
        $region31: #{tpu_custom_call.1} parent=23 // pred_region
          %s268 = sand.u32 %s22, 1
          %s269 = scalar_lea.sflag [#allocation7], %s268
          %s270 = sand.u32 %s91, 1
          %s271 = smul.addr %s270, 16
          %s272 = scalar_lea.vmem [#allocation8], %s271
          %274 = vsyncadd %s269, 0
          %s275 = smul.addr %s30, 4
          %s276 = smul.addr %s275, 4
          %s277 = scalar_lea.hbm %s2, %s276
          %s278 = sshll.u32 %s277, 4
          %s279 = int_to_ptr.hbm [resolvable:$true] %s278
          %s280 = sshll.u32 %s272, 4
          %s281 = int_to_ptr.vmem [resolvable:$true] %s280
          %286 = dma.hbm_to_vmem [thread:$0]  %s279, 256, %s281, %s269, 64, 64, 4
        $region32: #{tpu_custom_call.1} parent=23 // pred_fallthru
          _
        // Predicated region
        $region33: #{tpu_custom_call.1} parent=23 // pred_check
          %p287 = pneg %p127
        $region34: #{tpu_custom_call.1} parent=23 // pred_check_branch
          %289 = sbr.rel (%p287) target = $region36
        $region35: #{tpu_custom_call.1} parent=23 // pred_region
          %s290 = sand.u32 %s22, 1
          %s291 = scalar_lea.sflag [#allocation10], %s290
          %s292 = sand.u32 %s117, 1
          %s293 = scalar_lea.vmem [#allocation9], %s292
          %295 = vsyncadd %s291, 0
          %s296 = scalar_lea.hbm %s3, %s30
          %s298 = sshll.u32 %s296, 4
          %s299 = int_to_ptr.hbm [resolvable:$true] %s298
          %s300 = sshll.u32 %s293, 4
          %s301 = int_to_ptr.vmem [resolvable:$true] %s300
          %303 = dma.hbm_to_vmem [thread:$0]  %s299, 16, %s301, %s291
        $region36: #{tpu_custom_call.1} parent=23 // pred_fallthru
          _
        // Predicated region
        $region37: #{tpu_custom_call.1} parent=23 // pred_check
          %p304 = pneg %p153
        $region38: #{tpu_custom_call.1} parent=23 // pred_check_branch
          %306 = sbr.rel (%p304) target = $region40
        $region39: #{tpu_custom_call.1} parent=23 // pred_region
          %s307 = sand.u32 %s22, 1
          %s308 = scalar_lea.sflag [#allocation10], %s307
          %s309 = sand.u32 %s143, 1
          %s310 = smul.addr %s309, 16
          %s311 = scalar_lea.vmem [#allocation11], %s310
          %313 = vsyncadd %s308, 0
          %s314 = smul.addr %s30, 4
          %s315 = smul.addr %s314, 4
          %s316 = scalar_lea.hbm %s4, %s315
          %s317 = sshll.u32 %s316, 4
          %s318 = int_to_ptr.hbm [resolvable:$true] %s317
          %s319 = sshll.u32 %s311, 4
          %s320 = int_to_ptr.vmem [resolvable:$true] %s319
          %325 = dma.hbm_to_vmem [thread:$0]  %s318, 256, %s320, %s308, 64, 64, 4
        $region40: #{tpu_custom_call.1} parent=23 // pred_fallthru
          _
      $region24: #{tpu_custom_call.1} parent=5 // pred_fallthru
        _
      %p326 = scmp.le.s32.totalorder 1, %s22
      %p327 = scmp.lt.s32.totalorder %s22, 9
      %p328 = pnand %p326, %p327
      %p329 = pneg %p328
      // Predicated region
      $region41: #{tpu_custom_call.1} parent=5 // pred_check
        _
      $region42: #{tpu_custom_call.1} parent=5 // pred_check_branch
        %331 = sbr.rel (%p328) target = $region44
      $region43: #{tpu_custom_call.1} parent=5 // pred_region
        %s332 = ssub.s32 %s22, 1
        // Predicated region
        $region45: #{tpu_custom_call.1} parent=43 // pred_check
          %p333 = pneg %p55
        $region46: #{tpu_custom_call.1} parent=43 // pred_check_branch
          %335 = sbr.rel (%p333) target = $region48
        $region47: #{tpu_custom_call.1} parent=43 // pred_region
          %337 = dma.done [#allocation4], 256
        $region48: #{tpu_custom_call.1} parent=43 // pred_fallthru
          _
        %s338 = sand.u32 %s27, 1
        %s339 = scalar_lea.sflag [#allocation7], %s338
        %s340 = sand.u32 %s68, 1
        %s341 = smul.addr %s340, 32
        %s342 = scalar_lea.vmem [#allocation6], %s341
        // Predicated region
        $region49: #{tpu_custom_call.1} parent=43 // pred_check
          %p343 = pneg %p81
        $region50: #{tpu_custom_call.1} parent=43 // pred_check_branch
          %345 = sbr.rel (%p343) target = $region52
        $region51: #{tpu_custom_call.1} parent=43 // pred_region
          %347 = dma.done %s339, 512
        $region52: #{tpu_custom_call.1} parent=43 // pred_fallthru
          _
        %s348 = sand.u32 %s27, 1
        %s349 = scalar_lea.sflag [#allocation7], %s348
        %s350 = sand.u32 %s94, 1
        %s351 = smul.addr %s350, 16
        %s352 = scalar_lea.vmem [#allocation8], %s351
        // Predicated region
        $region53: #{tpu_custom_call.1} parent=43 // pred_check
          %p353 = pneg %p107
        $region54: #{tpu_custom_call.1} parent=43 // pred_check_branch
          %355 = sbr.rel (%p353) target = $region56
        $region55: #{tpu_custom_call.1} parent=43 // pred_region
          %357 = dma.done %s349, 256
        $region56: #{tpu_custom_call.1} parent=43 // pred_fallthru
          _
        %s358 = sand.u32 %s27, 1
        %s359 = scalar_lea.sflag [#allocation10], %s358
        %s360 = sand.u32 %s120, 1
        %s361 = scalar_lea.vmem [#allocation9], %s360
        // Predicated region
        $region57: #{tpu_custom_call.1} parent=43 // pred_check
          %p362 = pneg %p133
        $region58: #{tpu_custom_call.1} parent=43 // pred_check_branch
          %364 = sbr.rel (%p362) target = $region60
        $region59: #{tpu_custom_call.1} parent=43 // pred_region
          %366 = dma.done %s359, 16
        $region60: #{tpu_custom_call.1} parent=43 // pred_fallthru
          _
        %s367 = sand.u32 %s27, 1
        %s368 = scalar_lea.sflag [#allocation10], %s367
        %s369 = sand.u32 %s146, 1
        %s370 = smul.addr %s369, 16
        %s371 = scalar_lea.vmem [#allocation11], %s370
        // Predicated region
        $region61: #{tpu_custom_call.1} parent=43 // pred_check
          %p372 = pneg %p159
        $region62: #{tpu_custom_call.1} parent=43 // pred_check_branch
          %374 = sbr.rel (%p372) target = $region64
        $region63: #{tpu_custom_call.1} parent=43 // pred_region
          %376 = dma.done %s368, 256
        $region64: #{tpu_custom_call.1} parent=43 // pred_fallthru
          _
        %p377 = pneg %p55
        %p378 = pneg %p52
        %s379 = sand.u32 %s27, 1
        %s380 = scalar_lea.sflag [#allocation7], %s379
        %s381 = sand.u32 %s68, 1
        %s382 = smul.addr %s381, 32
        %s383 = scalar_lea.vmem [#allocation6], %s382
        %p384 = pneg %p81
        %p385 = pneg %p78
        %s386 = sand.u32 %s27, 1
        %s387 = scalar_lea.sflag [#allocation7], %s386
        %s388 = sand.u32 %s94, 1
        %s389 = smul.addr %s388, 16
        %s390 = scalar_lea.vmem [#allocation8], %s389
        %p391 = pneg %p107
        %p392 = pneg %p104
        %s393 = sand.u32 %s27, 1
        %s394 = scalar_lea.sflag [#allocation10], %s393
        %s395 = sand.u32 %s120, 1
        %s396 = scalar_lea.vmem [#allocation9], %s395
        %p397 = pneg %p133
        %p398 = pneg %p130
        %s399 = sand.u32 %s27, 1
        %s400 = scalar_lea.sflag [#allocation10], %s399
        %s401 = sand.u32 %s146, 1
        %s402 = smul.addr %s401, 16
        %s403 = scalar_lea.vmem [#allocation11], %s402
        %p404 = pneg %p159
        %p405 = pneg %p156
        %p406 = pneg %p180
        %p407 = pneg %p177
        %p408 = pneg %p206
        %p409 = pneg %p203
        %s410 = sand.u32 %s193, 1
        %s411 = scalar_lea.sflag [#allocation5], %s410
        %s412 = sand.u32 %s193, 1
        %s413 = smul.addr %s412, 64
        %s414 = scalar_lea.vmem [#allocation12], %s413
        %s415 = smul.u32 4, %s31
        %s416 = smul.u32 4, %s31
        %v418 = vld [vmem:[%s352] sm:$0xf]
        %v419 = vld [vmem:[%s352 + $0x4] sm:$0xf]
        %v420 = vld [vmem:[%s352 + $0x8] sm:$0xf]
        %v421 = vld [vmem:[%s352 + $0xc] sm:$0xf]
        %v422 = vld [vmem:[%s361] sm:$0x1]
        %v423 = vld [vmem:[%s342] sm:$0xf]
        %v424 = vld [vmem:[%s342 + $0x4] sm:$0xf]
        %v425 = vld [vmem:[%s342 + $0x8] sm:$0xf]
        %v426 = vld [vmem:[%s342 + $0xc] sm:$0xf]
        %v427 = vld [vmem:[%s342 + $0x10] sm:$0xf]
        %v428 = vld [vmem:[%s342 + $0x14] sm:$0xf]
        %v429 = vld [vmem:[%s342 + $0x18] sm:$0xf]
        %v430 = vld [vmem:[%s342 + $0x1c] sm:$0xf]
        %v432 = vperm.slane %v422, 0
        %v442 = vunpack.c.l.b16 %v423
        %v443 = vunpack.c.l.b16 %v424
        %v444 = vunpack.c.l.b16 %v425
        %v445 = vunpack.c.l.b16 %v426
        %v446 = vunpack.c.l.b16 %v427
        %v447 = vunpack.c.l.b16 %v428
        %v448 = vunpack.c.l.b16 %v429
        %v449 = vunpack.c.l.b16 %v430
        %v450 = vpack.c.b16 %v443, %v442
        %v451 = vpack.c.b16 %v445, %v444
        %v452 = vpack.c.b16 %v447, %v446
        %v453 = vpack.c.b16 %v449, %v448
        %v458 = vunpack.c.l.b16 %v418
        %v459 = vunpack.c.l.b16 %v419
        %v460 = vunpack.c.l.b16 %v420
        %v461 = vunpack.c.l.b16 %v421
        %v462 = vpack.c.b16 %v459, %v458
        %v463 = vpack.c.b16 %v461, %v460
        %vm466 = vcmask 261120
        %v468 = vsel %vm466, %v450, 0
        %v471 = vsel %vm466, %v451, 0
        %v474 = vsel %vm466, %v452, 0
        %v477 = vsel %vm466, %v453, 0
        %479 = vmatpush.bf16.msra.mxu0 0
        %480 = vmatpush.bf16.msra.mxu0 0
        %481 = vmatpush.bf16.msra.mxu0 0
        %482 = vmatpush.bf16.msra.mxu0 0
        %483 = vmatpush.bf16.msra.mxu0 0
        %484 = vmatpush.bf16.msra.mxu0 0
        %485 = vmatpush.bf16.msra.mxu0 %v463
        %486 = vmatpush.bf16.msra.mxu0 %v462
        %487 = vmatmul.bf16.gmra.mxu0 %v468
        %v488 = vpop.f32.mrf.mxu0
        %v489 = vadd.f32 %v432, %v488
        %v490 = vpop.f32.mrf.mxu0
        %v491 = vadd.f32 %v432, %v490
        %492 = vmatmul.bf16.gmra.mxu0 %v471
        %v493 = vpop.f32.mrf.mxu0
        %v494 = vadd.f32 %v432, %v493
        %v495 = vpop.f32.mrf.mxu0
        %v496 = vadd.f32 %v432, %v495
        %497 = vmatmul.bf16.gmra.mxu0 %v474
        %v498 = vpop.f32.mrf.mxu0
        %v499 = vadd.f32 %v432, %v498
        %v500 = vpop.f32.mrf.mxu0
        %v501 = vadd.f32 %v432, %v500
        %502 = vmatmul.bf16.gmra.mxu0 %v477
        %v503 = vpop.f32.mrf.mxu0
        %v504 = vadd.f32 %v432, %v503
        %v505 = vpop.f32.mrf.mxu0
        %v506 = vadd.f32 %v432, %v505
        %507 = vdwg.mxu0
        %v508 = vpack.c.bf16 %v489, %v489
        %v509 = vpack.c.bf16 %v491, %v491
        %v510 = vpack.c.bf16 %v494, %v494
        %v511 = vpack.c.bf16 %v496, %v496
        %v512 = vpack.c.bf16 %v499, %v499
        %v513 = vpack.c.bf16 %v501, %v501
        %v514 = vpack.c.bf16 %v504, %v504
        %v515 = vpack.c.bf16 %v506, %v506
        %v516 = vld [vmem:[#allocation3] sm:$0xff]
        %v517 = vld [vmem:[#allocation3 + $0x8] sm:$0xff]
        %v520 = vunpack.c.l.b16 %v508
        %v521 = vunpack.c.l.b16 %v509
        %v522 = vpack.c.b16 %v521, %v520
        %523 = vrot.lane.b32.xlu0 %v522, 96
        %v524 = vpop.permute.xlu0 %523
        %v526 = vsel %vm466, %v522, 0
        %v529 = vsel %vm466, %v524, 0
        %531 = vmatpush.bf16.xpose.msra.mxu0 0
        %532 = vmatpush.bf16.xpose.msra.mxu0 0
        %533 = vmatpush.bf16.xpose.msra.mxu0 0
        %534 = vmatpush.bf16.xpose.msra.mxu0 0
        %535 = vmatpush.bf16.xpose.msra.mxu0 0
        %536 = vmatpush.bf16.xpose.msra.mxu0 0
        %537 = vmatpush.bf16.xpose.msra.mxu0 0
        %538 = vmatpush.bf16.xpose.msra.mxu0 %v529
        %539 = vmatmul.bf16.gmra.mxu0 %v526
        %v540 = vpop.f32.mrf.mxu0
        %v541 = vadd.f32 %v516, %v540
        %v542 = vpop.f32.mrf.mxu0
        %v543 = vadd.f32 %v517, %v542
        %544 = vdwg.mxu0
        %v547 = vunpack.c.l.b16 %v510
        %v548 = vunpack.c.l.b16 %v511
        %v549 = vpack.c.b16 %v548, %v547
        %550 = vrot.lane.b32.xlu0 %v549, 96
        %v551 = vpop.permute.xlu0 %550
        %v553 = vsel %vm466, %v549, 0
        %v556 = vsel %vm466, %v551, 0
        %558 = vmatpush.bf16.xpose.msra.mxu0 0
        %559 = vmatpush.bf16.xpose.msra.mxu0 0
        %560 = vmatpush.bf16.xpose.msra.mxu0 0
        %561 = vmatpush.bf16.xpose.msra.mxu0 0
        %562 = vmatpush.bf16.xpose.msra.mxu0 0
        %563 = vmatpush.bf16.xpose.msra.mxu0 0
        %564 = vmatpush.bf16.xpose.msra.mxu0 0
        %565 = vmatpush.bf16.xpose.msra.mxu0 %v556
        %566 = vmatmul.bf16.gmra.mxu0 %v553
        %v567 = vpop.f32.mrf.mxu0
        %v568 = vadd.f32 %v516, %v567
        %v569 = vpop.f32.mrf.mxu0
        %v570 = vadd.f32 %v517, %v569
        %571 = vdwg.mxu0
        %v574 = vunpack.c.l.b16 %v512
        %v575 = vunpack.c.l.b16 %v513
        %v576 = vpack.c.b16 %v575, %v574
        %577 = vrot.lane.b32.xlu0 %v576, 96
        %v578 = vpop.permute.xlu0 %577
        %v580 = vsel %vm466, %v576, 0
        %v583 = vsel %vm466, %v578, 0
        %585 = vmatpush.bf16.xpose.msra.mxu0 0
        %586 = vmatpush.bf16.xpose.msra.mxu0 0
        %587 = vmatpush.bf16.xpose.msra.mxu0 0
        %588 = vmatpush.bf16.xpose.msra.mxu0 0
        %589 = vmatpush.bf16.xpose.msra.mxu0 0
        %590 = vmatpush.bf16.xpose.msra.mxu0 0
        %591 = vmatpush.bf16.xpose.msra.mxu0 0
        %592 = vmatpush.bf16.xpose.msra.mxu0 %v583
        %593 = vmatmul.bf16.gmra.mxu0 %v580
        %v594 = vpop.f32.mrf.mxu0
        %v595 = vadd.f32 %v516, %v594
        %v596 = vpop.f32.mrf.mxu0
        %v597 = vadd.f32 %v517, %v596
        %598 = vdwg.mxu0
        %v601 = vunpack.c.l.b16 %v514
        %v602 = vunpack.c.l.b16 %v515
        %v603 = vpack.c.b16 %v602, %v601
        %604 = vrot.lane.b32.xlu0 %v603, 96
        %v605 = vpop.permute.xlu0 %604
        %v607 = vsel %vm466, %v603, 0
        %v610 = vsel %vm466, %v605, 0
        %612 = vmatpush.bf16.xpose.msra.mxu0 0
        %613 = vmatpush.bf16.xpose.msra.mxu0 0
        %614 = vmatpush.bf16.xpose.msra.mxu0 0
        %615 = vmatpush.bf16.xpose.msra.mxu0 0
        %616 = vmatpush.bf16.xpose.msra.mxu0 0
        %617 = vmatpush.bf16.xpose.msra.mxu0 0
        %618 = vmatpush.bf16.xpose.msra.mxu0 0
        %619 = vmatpush.bf16.xpose.msra.mxu0 %v610
        %620 = vmatmul.bf16.gmra.mxu0 %v607
        %v621 = vpop.f32.mrf.mxu0
        %v622 = vadd.f32 %v516, %v621
        %v623 = vpop.f32.mrf.mxu0
        %v624 = vadd.f32 %v517, %v623
        %625 = vdwg.mxu0
        %vm626 = vcmask 130048
        %v627 = vsel %vm626, %v541, -inf
        %628 = vmax.xlane.f32.xlu0 %v627
        %v629 = vpop.xlane.xlu0 %628
        %v630 = vsel %vm626, %v543, -inf
        %631 = vmax.xlane.f32.xlu0 %v630
        %v632 = vpop.xlane.xlu0 %631
        %v633 = vsel %vm626, %v568, -inf
        %634 = vmax.xlane.f32.xlu0 %v633
        %v635 = vpop.xlane.xlu0 %634
        %v636 = vsel %vm626, %v570, -inf
        %637 = vmax.xlane.f32.xlu0 %v636
        %v638 = vpop.xlane.xlu0 %637
        %v639 = vsel %vm626, %v595, -inf
        %640 = vmax.xlane.f32.xlu0 %v639
        %v641 = vpop.xlane.xlu0 %640
        %v642 = vsel %vm626, %v597, -inf
        %643 = vmax.xlane.f32.xlu0 %v642
        %v644 = vpop.xlane.xlu0 %643
        %v645 = vsel %vm626, %v622, -inf
        %646 = vmax.xlane.f32.xlu0 %v645
        %v647 = vpop.xlane.xlu0 %646
        %v648 = vsel %vm626, %v624, -inf
        %649 = vmax.xlane.f32.xlu0 %v648
        %v650 = vpop.xlane.xlu0 %649
        %v651 = vsub.f32 %v541, %v629
        %v652 = vsub.f32 %v543, %v632
        %v653 = vsub.f32 %v568, %v635
        %v654 = vsub.f32 %v570, %v638
        %v655 = vsub.f32 %v595, %v641
        %v656 = vsub.f32 %v597, %v644
        %v657 = vsub.f32 %v622, %v647
        %v658 = vsub.f32 %v624, %v650
        %v659 = vmul.f32 %v651, 1.442695
        %v660 = vpow.pop %v659
        %v661 = vmul.f32 %v652, 1.442695
        %v662 = vpow.pop %v661
        %v663 = vmul.f32 %v653, 1.442695
        %v664 = vpow.pop %v663
        %v665 = vmul.f32 %v654, 1.442695
        %v666 = vpow.pop %v665
        %v667 = vmul.f32 %v655, 1.442695
        %v668 = vpow.pop %v667
        %v669 = vmul.f32 %v656, 1.442695
        %v670 = vpow.pop %v669
        %v671 = vmul.f32 %v657, 1.442695
        %v672 = vpow.pop %v671
        %v673 = vmul.f32 %v658, 1.442695
        %v674 = vpow.pop %v673
        %v675 = vsel %vm626, %v660, 0.0
        %676 = vadd.xlane.f32.xlu0 %v675
        %v677 = vpop.xlane.xlu0 %676
        %v678 = vsel %vm626, %v662, 0.0
        %679 = vadd.xlane.f32.xlu0 %v678
        %v680 = vpop.xlane.xlu0 %679
        %v681 = vsel %vm626, %v664, 0.0
        %682 = vadd.xlane.f32.xlu0 %v681
        %v683 = vpop.xlane.xlu0 %682
        %v684 = vsel %vm626, %v666, 0.0
        %685 = vadd.xlane.f32.xlu0 %v684
        %v686 = vpop.xlane.xlu0 %685
        %v687 = vsel %vm626, %v668, 0.0
        %688 = vadd.xlane.f32.xlu0 %v687
        %v689 = vpop.xlane.xlu0 %688
        %v690 = vsel %vm626, %v670, 0.0
        %691 = vadd.xlane.f32.xlu0 %v690
        %v692 = vpop.xlane.xlu0 %691
        %v693 = vsel %vm626, %v672, 0.0
        %694 = vadd.xlane.f32.xlu0 %v693
        %v695 = vpop.xlane.xlu0 %694
        %v696 = vsel %vm626, %v674, 0.0
        %697 = vadd.xlane.f32.xlu0 %v696
        %v698 = vpop.xlane.xlu0 %697
        %v699 = vrcp.pop %v677
        %v700 = vrcp.pop %v680
        %v701 = vrcp.pop %v683
        %v702 = vrcp.pop %v686
        %v703 = vrcp.pop %v689
        %v704 = vrcp.pop %v692
        %v705 = vrcp.pop %v695
        %v706 = vrcp.pop %v698
        %v707 = vmul.f32 %v660, %v699
        %v708 = vmul.f32 %v662, %v700
        %v709 = vmul.f32 %v664, %v701
        %v710 = vmul.f32 %v666, %v702
        %v711 = vmul.f32 %v668, %v703
        %v712 = vmul.f32 %v670, %v704
        %v713 = vmul.f32 %v672, %v705
        %v714 = vmul.f32 %v674, %v706
        %v715 = vpack.c.bf16 %v707, %v707
        %v716 = vpack.c.bf16 %v708, %v708
        %v717 = vpack.c.bf16 %v709, %v709
        %v718 = vpack.c.bf16 %v710, %v710
        %v719 = vpack.c.bf16 %v711, %v711
        %v720 = vpack.c.bf16 %v712, %v712
        %v721 = vpack.c.bf16 %v713, %v713
        %v722 = vpack.c.bf16 %v714, %v714
        %v725 = vunpack.c.l.b16 %v715
        %v726 = vunpack.c.l.b16 %v716
        %v727 = vpack.c.b16 %v726, %v725
        %728 = vrot.lane.b32.xlu0 %v522, 64
        %v729 = vpop.permute.xlu0 %728
        %v732 = vsel %vm626, %v727, 0
        %734 = vmatpush.bf16.msra.mxu0 0
        %735 = vmatpush.bf16.msra.mxu0 0
        %736 = vmatpush.bf16.msra.mxu0 0
        %737 = vmatpush.bf16.msra.mxu0 0
        %738 = vmatpush.bf16.msra.mxu0 0
        %739 = vmatpush.bf16.msra.mxu0 0
        %740 = vmatpush.bf16.msra.mxu0 0
        %741 = vmatpush.bf16.msra.mxu0 %v729
        %742 = vmatmul.bf16.gmra.mxu0 %v732
        %v743 = vpop.f32.mrf.mxu0
        %v744 = vadd.f32 0.0, %v743
        %v745 = vpop.f32.mrf.mxu0
        %v746 = vadd.f32 0.0, %v745
        %747 = vdwg.mxu0
        %v750 = vunpack.c.l.b16 %v717
        %v751 = vunpack.c.l.b16 %v718
        %v752 = vpack.c.b16 %v751, %v750
        %753 = vrot.lane.b32.xlu0 %v549, 64
        %v754 = vpop.permute.xlu0 %753
        %v757 = vsel %vm626, %v752, 0
        %759 = vmatpush.bf16.msra.mxu0 0
        %760 = vmatpush.bf16.msra.mxu0 0
        %761 = vmatpush.bf16.msra.mxu0 0
        %762 = vmatpush.bf16.msra.mxu0 0
        %763 = vmatpush.bf16.msra.mxu0 0
        %764 = vmatpush.bf16.msra.mxu0 0
        %765 = vmatpush.bf16.msra.mxu0 0
        %766 = vmatpush.bf16.msra.mxu0 %v754
        %767 = vmatmul.bf16.gmra.mxu0 %v757
        %v768 = vpop.f32.mrf.mxu0
        %v769 = vadd.f32 0.0, %v768
        %v770 = vpop.f32.mrf.mxu0
        %v771 = vadd.f32 0.0, %v770
        %772 = vdwg.mxu0
        %v775 = vunpack.c.l.b16 %v719
        %v776 = vunpack.c.l.b16 %v720
        %v777 = vpack.c.b16 %v776, %v775
        %778 = vrot.lane.b32.xlu0 %v576, 64
        %v779 = vpop.permute.xlu0 %778
        %v782 = vsel %vm626, %v777, 0
        %784 = vmatpush.bf16.msra.mxu0 0
        %785 = vmatpush.bf16.msra.mxu0 0
        %786 = vmatpush.bf16.msra.mxu0 0
        %787 = vmatpush.bf16.msra.mxu0 0
        %788 = vmatpush.bf16.msra.mxu0 0
        %789 = vmatpush.bf16.msra.mxu0 0
        %790 = vmatpush.bf16.msra.mxu0 0
        %791 = vmatpush.bf16.msra.mxu0 %v779
        %792 = vmatmul.bf16.gmra.mxu0 %v782
        %v793 = vpop.f32.mrf.mxu0
        %v794 = vadd.f32 0.0, %v793
        %v795 = vpop.f32.mrf.mxu0
        %v796 = vadd.f32 0.0, %v795
        %797 = vdwg.mxu0
        %v800 = vunpack.c.l.b16 %v721
        %v801 = vunpack.c.l.b16 %v722
        %v802 = vpack.c.b16 %v801, %v800
        %803 = vrot.lane.b32.xlu0 %v603, 64
        %v804 = vpop.permute.xlu0 %803
        %v807 = vsel %vm626, %v802, 0
        %809 = vmatpush.bf16.msra.mxu0 0
        %810 = vmatpush.bf16.msra.mxu0 0
        %811 = vmatpush.bf16.msra.mxu0 0
        %812 = vmatpush.bf16.msra.mxu0 0
        %813 = vmatpush.bf16.msra.mxu0 0
        %814 = vmatpush.bf16.msra.mxu0 0
        %815 = vmatpush.bf16.msra.mxu0 0
        %816 = vmatpush.bf16.msra.mxu0 %v804
        %817 = vmatmul.bf16.gmra.mxu0 %v807
        %v818 = vpop.f32.mrf.mxu0
        %v819 = vadd.f32 0.0, %v818
        %v820 = vpop.f32.mrf.mxu0
        %v821 = vadd.f32 0.0, %v820
        %822 = vdwg.mxu0
        %p823 = scmp.eq.s32.totalorder %s32, 0
        // Predicated region
        $region65: #{tpu_custom_call.1} parent=43 // pred_check
          %p824 = pneg %p823
        $region66: #{tpu_custom_call.1} parent=43 // pred_check_branch
          %826 = sbr.rel (%p824) target = $region68
        $region67: #{tpu_custom_call.1} parent=43 // pred_region
          %827 = vst.msk [vmem:[#allocation2] sm:$0xff] %vm466, 0.0
          %828 = vst.msk [vmem:[#allocation2 + $0x8] sm:$0xff] %vm466, 0.0
          %829 = vst.msk [vmem:[#allocation2 + $0x10] sm:$0xff] %vm466, 0.0
          %830 = vst.msk [vmem:[#allocation2 + $0x18] sm:$0xff] %vm466, 0.0
          %831 = vst.msk [vmem:[#allocation2 + $0x20] sm:$0xff] %vm466, 0.0
          %832 = vst.msk [vmem:[#allocation2 + $0x28] sm:$0xff] %vm466, 0.0
          %833 = vst.msk [vmem:[#allocation2 + $0x30] sm:$0xff] %vm466, 0.0
          %834 = vst.msk [vmem:[#allocation2 + $0x38] sm:$0xff] %vm466, 0.0
        $region68: #{tpu_custom_call.1} parent=43 // pred_fallthru
          _
        %v835 = vld [vmem:[#allocation2] sm:$0xff]
        %v836 = vld [vmem:[#allocation2 + $0x8] sm:$0xff]
        %v837 = vld [vmem:[#allocation2 + $0x10] sm:$0xff]
        %v838 = vld [vmem:[#allocation2 + $0x18] sm:$0xff]
        %v839 = vld [vmem:[#allocation2 + $0x20] sm:$0xff]
        %v840 = vld [vmem:[#allocation2 + $0x28] sm:$0xff]
        %v841 = vld [vmem:[#allocation2 + $0x30] sm:$0xff]
        %v842 = vld [vmem:[#allocation2 + $0x38] sm:$0xff]
        %v843 = vpack.c.bf16 %v746, %v744
        %v844 = vpack.c.bf16 %v771, %v769
        %v845 = vpack.c.bf16 %v796, %v794
        %v846 = vpack.c.bf16 %v821, %v819
        %v847 = vld [vmem:[%s371] sm:$0xf]
        %v848 = vld [vmem:[%s371 + $0x4] sm:$0xf]
        %v849 = vld [vmem:[%s371 + $0x8] sm:$0xf]
        %v850 = vld [vmem:[%s371 + $0xc] sm:$0xf]
        %v855 = vunpack.c.l.b16 %v847
        %v856 = vunpack.c.l.b16 %v848
        %v857 = vunpack.c.l.b16 %v849
        %v858 = vunpack.c.l.b16 %v850
        %v859 = vpack.c.b16 %v856, %v855
        %v860 = vpack.c.b16 %v858, %v857
        %v864 = vsel %vm466, %v843, 0
        %v867 = vsel %vm466, %v844, 0
        %v870 = vsel %vm466, %v845, 0
        %v873 = vsel %vm466, %v846, 0
        %875 = vmatpush.bf16.msra.mxu0 0
        %876 = vmatpush.bf16.msra.mxu0 0
        %877 = vmatpush.bf16.msra.mxu0 0
        %878 = vmatpush.bf16.msra.mxu0 0
        %879 = vmatpush.bf16.msra.mxu0 0
        %880 = vmatpush.bf16.msra.mxu0 0
        %881 = vmatpush.bf16.msra.mxu0 %v860
        %882 = vmatpush.bf16.msra.mxu0 %v859
        %883 = vmatmul.bf16.gmra.mxu0 %v864
        %v884 = vpop.f32.mrf.mxu0
        %v885 = vadd.f32 0.0, %v884
        %v886 = vpop.f32.mrf.mxu0
        %v887 = vadd.f32 0.0, %v886
        %888 = vmatmul.bf16.gmra.mxu0 %v867
        %v889 = vpop.f32.mrf.mxu0
        %v890 = vadd.f32 0.0, %v889
        %v891 = vpop.f32.mrf.mxu0
        %v892 = vadd.f32 0.0, %v891
        %893 = vmatmul.bf16.gmra.mxu0 %v870
        %v894 = vpop.f32.mrf.mxu0
        %v895 = vadd.f32 0.0, %v894
        %v896 = vpop.f32.mrf.mxu0
        %v897 = vadd.f32 0.0, %v896
        %898 = vmatmul.bf16.gmra.mxu0 %v873
        %v899 = vpop.f32.mrf.mxu0
        %v900 = vadd.f32 0.0, %v899
        %v901 = vpop.f32.mrf.mxu0
        %v902 = vadd.f32 0.0, %v901
        %903 = vdwg.mxu0
        %v904 = vadd.f32 %v835, %v885
        %v905 = vadd.f32 %v836, %v887
        %v906 = vadd.f32 %v837, %v890
        %v907 = vadd.f32 %v838, %v892
        %v908 = vadd.f32 %v839, %v895
        %v909 = vadd.f32 %v840, %v897
        %v910 = vadd.f32 %v841, %v900
        %v911 = vadd.f32 %v842, %v902
        %912 = vst.msk [vmem:[#allocation2] sm:$0xff] %vm466, %v904
        %913 = vst.msk [vmem:[#allocation2 + $0x8] sm:$0xff] %vm466, %v905
        %914 = vst.msk [vmem:[#allocation2 + $0x10] sm:$0xff] %vm466, %v906
        %915 = vst.msk [vmem:[#allocation2 + $0x18] sm:$0xff] %vm466, %v907
        %916 = vst.msk [vmem:[#allocation2 + $0x20] sm:$0xff] %vm466, %v908
        %917 = vst.msk [vmem:[#allocation2 + $0x28] sm:$0xff] %vm466, %v909
        %918 = vst.msk [vmem:[#allocation2 + $0x30] sm:$0xff] %vm466, %v910
        %919 = vst.msk [vmem:[#allocation2 + $0x38] sm:$0xff] %vm466, %v911
        %p920 = scmp.eq.s32.totalorder %s32, 3
        // Predicated region
        $region69: #{tpu_custom_call.1} parent=43 // pred_check
          %p921 = pneg %p920
        $region70: #{tpu_custom_call.1} parent=43 // pred_check_branch
          %923 = sbr.rel (%p921) target = $region72
        $region71: #{tpu_custom_call.1} parent=43 // pred_region
          %v924 = vld [vmem:[#allocation2] sm:$0xff]
          %v925 = vld [vmem:[#allocation2 + $0x8] sm:$0xff]
          %v926 = vld [vmem:[#allocation2 + $0x10] sm:$0xff]
          %v927 = vld [vmem:[#allocation2 + $0x18] sm:$0xff]
          %v928 = vld [vmem:[#allocation2 + $0x20] sm:$0xff]
          %v929 = vld [vmem:[#allocation2 + $0x28] sm:$0xff]
          %v930 = vld [vmem:[#allocation2 + $0x30] sm:$0xff]
          %v931 = vld [vmem:[#allocation2 + $0x38] sm:$0xff]
          %v932 = vld [vmem:[%s5] sm:$0x1]
          %v934 = vperm.slane %v932, 0
          %v936 = vadd.f32 %v924, %v934
          %v937 = vadd.f32 %v925, %v934
          %v938 = vadd.f32 %v926, %v934
          %v939 = vadd.f32 %v927, %v934
          %v940 = vadd.f32 %v928, %v934
          %v941 = vadd.f32 %v929, %v934
          %v942 = vadd.f32 %v930, %v934
          %v943 = vadd.f32 %v931, %v934
          %944 = vst.msk [vmem:[%s414] sm:$0xff] %vm466, %v936
          %945 = vst.msk [vmem:[%s414 + $0x8] sm:$0xff] %vm466, %v937
          %946 = vst.msk [vmem:[%s414 + $0x10] sm:$0xff] %vm466, %v938
          %947 = vst.msk [vmem:[%s414 + $0x18] sm:$0xff] %vm466, %v939
          %948 = vst.msk [vmem:[%s414 + $0x20] sm:$0xff] %vm466, %v940
          %949 = vst.msk [vmem:[%s414 + $0x28] sm:$0xff] %vm466, %v941
          %950 = vst.msk [vmem:[%s414 + $0x30] sm:$0xff] %vm466, %v942
          %951 = vst.msk [vmem:[%s414 + $0x38] sm:$0xff] %vm466, %v943
        $region72: #{tpu_custom_call.1} parent=43 // pred_fallthru
          _
        %s952 = sand.u32 %s193, 1
        %s953 = scalar_lea.sflag [#allocation5], %s952
        %s954 = sand.u32 %s193, 1
        %s955 = smul.addr %s954, 64
        %s956 = scalar_lea.vmem [#allocation12], %s955
        // Predicated region
        $region73: #{tpu_custom_call.1} parent=43 // pred_check
          %p957 = pneg %p203
        $region74: #{tpu_custom_call.1} parent=43 // pred_check_branch
          %959 = sbr.rel (%p957) target = $region76
        $region75: #{tpu_custom_call.1} parent=43 // pred_region
          %s960 = smul.u32 4, %s31
          %962 = vsyncadd %s953, 0
          %s963 = smul.addr %s960, 2
          %s964 = smul.addr %s963, 8
          %s965 = scalar_lea.hbm %s6, %s964
          %s966 = sshll.u32 %s956, 4
          %s967 = int_to_ptr.vmem [resolvable:$true] %s966
          %s968 = sshll.u32 %s965, 4
          %s969 = int_to_ptr.hbm [resolvable:$true] %s968
          %974 = dma.vmem_to_hbm [thread:$0]  %s967, 1024, %s969, %s953, 128, 128, 8
        $region76: #{tpu_custom_call.1} parent=43 // pred_fallthru
          _
      $region44: #{tpu_custom_call.1} parent=5 // pred_fallthru
        _
      %p975 = scmp.le.s32.totalorder 2, %s22
      // Predicated region
      $region77: #{tpu_custom_call.1} parent=5 // pred_check
        %p976 = pneg %p975
      $region78: #{tpu_custom_call.1} parent=5 // pred_check_branch
        %978 = sbr.rel (%p976) target = $region80
      $region79: #{tpu_custom_call.1} parent=5 // pred_region
        %s979 = ssub.s32 %s22, 2
        // Predicated region
        $region81: #{tpu_custom_call.1} parent=79 // pred_check
          %p980 = pneg %p209
        $region82: #{tpu_custom_call.1} parent=79 // pred_check_branch
          %982 = sbr.rel (%p980) target = $region84
        $region83: #{tpu_custom_call.1} parent=79 // pred_region
          %s983 = sand.u32 %s194, 1
          %s984 = scalar_lea.sflag [#allocation5], %s983
          %s985 = sand.u32 %s194, 1
          %s986 = smul.addr %s985, 64
          %s987 = scalar_lea.vmem [#allocation12], %s986
          %989 = dma.done %s984, 1024
        $region84: #{tpu_custom_call.1} parent=79 // pred_fallthru
          _
      $region80: #{tpu_custom_call.1} parent=5 // pred_fallthru
        _
    $region6: #{tpu_custom_call.1} parent=1 // loop_footer
      %s26 = sadd.s32 1, %s22
    $region7: #{tpu_custom_call.1} parent=1 // loop_footer_branch
      %21 = sbr.rel target = $region3
    $region8: #{tpu_custom_call.1} parent=1 // loop_exit
      _
    %990 = vsyncpa [#allocation4], 1
    %s991 = scalar_lea.sflag [#allocation4], 1
    %992 = vsyncpa %s991, 1
    %993 = vsyncpa [#allocation7], 1
    %s994 = scalar_lea.sflag [#allocation7], 1
    %995 = vsyncpa %s994, 1
    %996 = vsyncpa [#allocation10], 1
    %s997 = scalar_lea.sflag [#allocation10], 1
    %998 = vsyncpa %s997, 1
    %999 = vsyncpa [#allocation5], 1
    %s1000 = scalar_lea.sflag [#allocation5], 1
    %1001 = vsyncpa %s1000, 1

</llo_original>
